<compile_context>
chip_gen: v6e
topology: v6e:2x2x1
jax: 0.10.0
libtpu: 0.0.40
codegen_flags: <defaults>
</compile_context>

<pallas_src>
import functools

import jax
import jax.numpy as jnp
from jax.experimental import pallas as pl
from jax.experimental.pallas import tpu as pltpu

# ---- module "buffers" (deterministic, from __init__ defaults) ----------------
BF = 96.0
DIST_LIST = [0.5, 1, 1.5, 2, 5, 10, 20, 30, 50, 100]
IVD = [BF / d for d in DIST_LIST]                        # inv_dist_list (descending), len 10
BW = [IVD[j + 1] - IVD[j] for j in range(len(IVD) - 1)]  # bin_widths (negative), len 9
INV_BW = [1.0 / w for w in BW]                           # reciprocal widths (avoid in-kernel divide)
NBINS = len(IVD)                                         # 10

NSPLIT = 2          # explicit pixel split axis: both v7x TCs busy even at B == 1
TARGET = 32768      # pixels per grid tile (amortizes ~600-cycle step overhead)


def _vce_kernel(pred_ref, inv_ref, out_ref, acc_ref, *, tiles_per_core, tile8,
                hw8_pad, hw_valid, need_mask):
    c = pl.program_id(1)                                 # core-split axis
    j = pl.program_id(2)                                 # pixel-tile (reduction) axis

    @pl.when(j == 0)
    def _():
        acc_ref[...] = jnp.zeros_like(acc_ref)

    # ---- per-pixel path, dense (8, tile8) layout (full sublane occupancy) -------
    v = inv_ref[...].astype(jnp.float32)                 # (8, tile8)
    v = jnp.clip(v, IVD[-1], IVD[0])

    # bucketize: replicates len - torch.bucketize(v, flipped), then -1 & clamp
    count = jnp.zeros(v.shape, dtype=jnp.int32)
    for val in IVD:                                      # static loop, VPU elementwise
        count = count + (jnp.float32(val) >= v).astype(jnp.int32)
    bin_idx = jnp.clip(count - 1, 0, NBINS - 2)          # (8, tile8) in [0, 8]

    # lower bound / reciprocal bin width via static select chain (dense)
    lb = jnp.zeros_like(v)
    inv_w = jnp.zeros_like(v)
    for k in range(NBINS - 1):
        sel = bin_idx == k
        lb = jnp.where(sel, jnp.float32(IVD[k]), lb)
        inv_w = jnp.where(sel, jnp.float32(INV_BW[k]), inv_w)
    d = (v - lb) * inv_w                                 # (8, tile8) in [0, 1]

    # ---- channel loop over the (D, 8, tile8) pred block -------------------------
    # Axis-0 (channel) work is per-slab: sum of log(1-p) is 9 plain VPU adds, and the
    # two active channels (bin_idx / bin_idx + 1) are gathered with one compare per
    # channel (previous predicate carried) + where-selects -- no masked reductions.
    zf = jnp.zeros(v.shape, jnp.float32)
    sum_l1 = zf
    p_lo = zf
    p_hi = zf
    l1_lo = zf
    l1_hi = zf
    prev_sel = None
    for k in range(NBINS):
        pk = pred_ref[k].astype(jnp.float32)             # (8, tile8) channel slab
        l1k = jnp.maximum(jnp.log(1.0 - pk), -100.0)     # torch's per-term -100 clamp
        sum_l1 = sum_l1 + l1k
        if k >= 1:                                       # channel k is the "hi" bin of k-1
            p_hi = jnp.where(prev_sel, pk, p_hi)
            l1_hi = jnp.where(prev_sel, l1k, l1_hi)
        if k < NBINS - 1:                                # channel k is the "lo" bin of k
            sel = bin_idx == k
            p_lo = jnp.where(sel, pk, p_lo)
            l1_lo = jnp.where(sel, l1k, l1_lo)
            prev_sel = sel

    # only 2 log(p) per pixel, computed at full sublane occupancy
    lp_lo = jnp.maximum(jnp.log(p_lo), -100.0)
    lp_hi = jnp.maximum(jnp.log(p_hi), -100.0)

    # BCE summed over the D channels of each pixel (2-hot target sparsity):
    #   sum_c loss_c = -(sum_c L1_c + (1-d)*(Lp_lo - L1_lo) + d*(Lp_hi - L1_hi))
    loss_px = -(sum_l1 + (1.0 - d) * (lp_lo - l1_lo) + d * (lp_hi - l1_hi))

    if need_mask:  # zero out lanes that are wrapper pixel-padding
        row = jax.lax.broadcasted_iota(jnp.int32, loss_px.shape, 0)
        col = jax.lax.broadcasted_iota(jnp.int32, loss_px.shape, 1)
        gcol = (c * tiles_per_core + j) * tile8 + col
        loss_px = jnp.where(row * hw8_pad + gcol < hw_valid, loss_px, 0.0)

    # fold lanes tile8 -> 128 with pure VPU adds, accumulate into dense (8, 128) acc
    part = loss_px[:, 0:128]
    for g in range(1, tile8 // 128):
        part = part + loss_px[:, g * 128:(g + 1) * 128]
    acc_ref[...] += part

    @pl.when(j == tiles_per_core - 1)
    def _():
        out_ref[...] = acc_ref[...]


def volume_cross_entropy(pred_cost, inv_dist_true):
    """pred_cost: (B, D, H, W) probabilities in (0,1); inv_dist_true: (B, 1, H, W)."""
    B, D, H, W = pred_cost.shape
    assert D == NBINS
    HW = H * W

    # Pixel tiling: NSPLIT * tiles_per_core tiles of `tile` pixels, tile a multiple
    # of 8*128 and capped at TARGET.  VMEM @ tile=32768: pred block 1.25 MiB + inv
    # 128 KiB, double-buffered -> ~3 MiB, far under the scoped default everywhere
    # (including v7x's 64 MiB physical / 32 MiB scoped).
    tiles_per_core = max(1, -(-HW // (NSPLIT * TARGET)))
    tile = -(-HW // (NSPLIT * tiles_per_core))
    tile = -(-tile // 1024) * 1024
    hw_pad = tile * NSPLIT * tiles_per_core
    tile8 = tile // 8
    hw8_pad = hw_pad // 8
    need_mask = hw_pad != HW

    # Contiguous reshapes only -- no NCHW transpose (no extra HBM round trip).
    pred3d = pred_cost.reshape(B, D, HW)
    inv2d = inv_dist_true.reshape(B, HW)
    if need_mask:
        pad = hw_pad - HW
        # Pad values are benign (masked out in-kernel); keep pred inside (0, 1).
        pred3d = jnp.pad(pred3d, ((0, 0), (0, 0), (0, pad)), constant_values=0.5)
        inv2d = jnp.pad(inv2d, ((0, 0), (0, pad)), constant_values=IVD[0])
    # pixel hw -> (row hw // hw8_pad, col hw % hw8_pad) in BOTH arrays -> layouts match.
    pred4d = pred3d.reshape(B, D, 8, hw8_pad)
    inv3d = inv2d.reshape(B, 8, hw8_pad)

    out = pl.pallas_call(
        functools.partial(
            _vce_kernel, tiles_per_core=tiles_per_core, tile8=tile8,
            hw8_pad=hw8_pad, hw_valid=HW, need_mask=need_mask,
        ),
        out_shape=jax.ShapeDtypeStruct((B, NSPLIT, 8, 128), jnp.float32),
        grid_spec=pltpu.PrefetchScalarGridSpec(
            num_scalar_prefetch=0,
            grid=(B, NSPLIT, tiles_per_core),
            in_specs=[
                pl.BlockSpec((None, D, 8, tile8),
                             lambda b, c, j: (b, 0, 0, c * tiles_per_core + j)),
                pl.BlockSpec((None, 8, tile8),
                             lambda b, c, j: (b, 0, c * tiles_per_core + j)),
            ],
            out_specs=pl.BlockSpec((None, None, 8, 128),
                                   lambda b, c, j: (b, c, 0, 0)),
            scratch_shapes=[pltpu.VMEM((8, 128), jnp.float32)],
        ),
        compiler_params=pltpu.CompilerParams(
            # batch and core-split axes are independent (per-(b, core) partial sums)
            # -> shardable across the 2 TensorCores on v7x; pixel-tile axis reduces.
            dimension_semantics=("parallel", "parallel", "arbitrary"),
        ),
    )(pred4d, inv3d)

    return jnp.sum(out) / (B * D * H * W)


def volume_cross_entropy_ref(pred_cost, inv_dist_true):
    """Pure-JAX reference of the PyTorch forward (mask=None)."""
    ivd = jnp.array(IVD, jnp.float32)
    bw = jnp.array(BW, jnp.float32)
    B, D, H, W = pred_cost.shape
    v = jnp.clip(inv_dist_true.astype(jnp.float32), ivd[-1], ivd[0])
    count = jnp.sum(
        (ivd.reshape(1, 1, 1, 1, NBINS) >= v[..., None]).astype(jnp.int32), axis=-1
    )
    bin_idx = jnp.clip(count - 1, 0, NBINS - 2)
    lb = ivd[bin_idx]
    w = bw[bin_idx]
    d = (v - lb) / w
    c = jnp.arange(D, dtype=jnp.int32).reshape(1, D, 1, 1)
    t = jnp.where(c == bin_idx, 1.0 - d, 0.0) + jnp.where(c == bin_idx + 1, d, 0.0)
    p = pred_cost.astype(jnp.float32)
    logp = jnp.maximum(jnp.log(p), -100.0)
    log1mp = jnp.maximum(jnp.log(1.0 - p), -100.0)
    return jnp.mean(-(t * logp + (1.0 - t) * log1mp))


if __name__ == "__main__":
    def run_case(case_key, B, H, W):
        k1, k2 = jax.random.split(case_key)
        # pred_cost must be probabilities in (0, 1) for binary_cross_entropy
        pred_cost = jax.random.uniform(k1, (B, NBINS, H, W), jnp.float32, 0.01, 0.99)
        # ground-truth inverse distances spanning the bin range [0.96, 192]
        true_dist = jax.random.uniform(k2, (B, 1, H, W), jnp.float32, 0.5, 100.0)
        inv_dist_true = BF / true_dist
        loss = jax.block_until_ready(volume_cross_entropy(pred_cost, inv_dist_true))
        ref = jax.block_until_ready(volume_cross_entropy_ref(pred_cost, inv_dist_true))
        assert jnp.allclose(loss, ref, rtol=1e-4, atol=1e-5), (B, H, W, loss, ref)

    key = jax.random.PRNGKey(0)
    ka, kb, kc = jax.random.split(key, 3)
    run_case(ka, B=2, H=16, W=16)   # exercises pixel padding + in-kernel masking
    run_case(kb, B=2, H=16, W=17)   # odd pixel count, padding path
    run_case(kc, B=1, H=32, W=64)   # HW == 2048: no-padding path, B=1 core split

    print("KERNEL_OK")
</pallas_src>

<mosaic_0001>
module attributes {stable_mosaic.version = 11 : i64} {
  func.func @_vce_kernel(%arg0: i32, %arg1: i32, %arg2: i32, %arg3: memref<1x10x8x128xf32, #tpu.memory_space<vmem>>, %arg4: memref<1x8x128xf32, #tpu.memory_space<vmem>>, %arg5: memref<1x1x8x128xf32, #tpu.memory_space<vmem>>, %arg6: memref<8x128xf32, #tpu.memory_space<vmem>>) attributes {dimension_semantics = [#tpu.dimension_semantics<parallel>, #tpu.dimension_semantics<parallel>, #tpu.dimension_semantics<arbitrary>], iteration_bounds = array<i64: 2, 2, 1>, scalar_prefetch = 0 : i64, scratch_operands = 1 : i64, tpu.core_type = #tpu.core_type<tc>, window_params = [{transform_indices = @transform_0, window_bounds = array<i64: 1, 10, 8, 128>}, {transform_indices = @transform_1, window_bounds = array<i64: 1, 8, 128>}, {transform_indices = @transform_2, window_bounds = array<i64: 1, 1, 8, 128>}]} {
    %c0_i32 = arith.constant 0 : i32
    %0 = arith.cmpi eq, %arg2, %c0_i32 : i32
    %1 = arith.extui %0 : i1 to i32
    %c0_i32_0 = arith.constant 0 : i32
    %2 = arith.cmpi ne, %1, %c0_i32_0 : i32
    scf.if %2 {
      %cst_113 = arith.constant 0.000000e+00 : f32
      %285 = vector.broadcast %cst_113 : f32 to vector<8x128xf32>
      %c0_114 = arith.constant 0 : index
      %c0_115 = arith.constant 0 : index
      %286 = vector.load %arg6[%c0_114, %c0_115] : memref<8x128xf32, #tpu.memory_space<vmem>>, vector<8x128xf32>
      tpu.vector_store %arg6[%c0_114, %c0_115], %285 {strides = array<i32>} : memref<8x128xf32, #tpu.memory_space<vmem>>, vector<8x128xf32>,
    } else {
    }
    %c0 = arith.constant 0 : index
    %c0_1 = arith.constant 0 : index
    %c0_2 = arith.constant 0 : index
    %3 = vector.load %arg4[%c0, %c0_1, %c0_2] : memref<1x8x128xf32, #tpu.memory_space<vmem>>, vector<1x8x128xf32>
    %4 = vector.shape_cast %3 : vector<1x8x128xf32> to vector<8x128xf32>
    %cst = arith.constant 0.959999978 : f32
    %cst_3 = arith.constant 1.920000e+02 : f32
    %5 = vector.broadcast %cst : f32 to vector<8x128xf32>
    %6 = arith.maximumf %5, %4 : vector<8x128xf32>
    %7 = vector.broadcast %cst_3 : f32 to vector<8x128xf32>
    %8 = arith.minimumf %7, %6 : vector<8x128xf32>
    %c0_i32_4 = arith.constant 0 : i32
    %9 = vector.broadcast %c0_i32_4 : i32 to vector<8x128xi32>
    %cst_5 = arith.constant 1.920000e+02 : f32
    %10 = vector.broadcast %cst_5 : f32 to vector<8x128xf32>
    %11 = arith.cmpf oge, %10, %8 : vector<8x128xf32>
    %12 = arith.extui %11 : vector<8x128xi1> to vector<8x128xi32>
    %13 = arith.addi %9, %12 : vector<8x128xi32>
    %cst_6 = arith.constant 9.600000e+01 : f32
    %14 = vector.broadcast %cst_6 : f32 to vector<8x128xf32>
    %15 = arith.cmpf oge, %14, %8 : vector<8x128xf32>
    %16 = arith.extui %15 : vector<8x128xi1> to vector<8x128xi32>
    %17 = arith.addi %13, %16 : vector<8x128xi32>
    %cst_7 = arith.constant 6.400000e+01 : f32
    %18 = vector.broadcast %cst_7 : f32 to vector<8x128xf32>
    %19 = arith.cmpf oge, %18, %8 : vector<8x128xf32>
    %20 = arith.extui %19 : vector<8x128xi1> to vector<8x128xi32>
    %21 = arith.addi %17, %20 : vector<8x128xi32>
    %cst_8 = arith.constant 4.800000e+01 : f32
    %22 = vector.broadcast %cst_8 : f32 to vector<8x128xf32>
    %23 = arith.cmpf oge, %22, %8 : vector<8x128xf32>
    %24 = arith.extui %23 : vector<8x128xi1> to vector<8x128xi32>
    %25 = arith.addi %21, %24 : vector<8x128xi32>
    %cst_9 = arith.constant 1.920000e+01 : f32
    %26 = vector.broadcast %cst_9 : f32 to vector<8x128xf32>
    %27 = arith.cmpf oge, %26, %8 : vector<8x128xf32>
    %28 = arith.extui %27 : vector<8x128xi1> to vector<8x128xi32>
    %29 = arith.addi %25, %28 : vector<8x128xi32>
    %cst_10 = arith.constant 9.600000e+00 : f32
    %30 = vector.broadcast %cst_10 : f32 to vector<8x128xf32>
    %31 = arith.cmpf oge, %30, %8 : vector<8x128xf32>
    %32 = arith.extui %31 : vector<8x128xi1> to vector<8x128xi32>
    %33 = arith.addi %29, %32 : vector<8x128xi32>
    %cst_11 = arith.constant 4.800000e+00 : f32
    %34 = vector.broadcast %cst_11 : f32 to vector<8x128xf32>
    %35 = arith.cmpf oge, %34, %8 : vector<8x128xf32>
    %36 = arith.extui %35 : vector<8x128xi1> to vector<8x128xi32>
    %37 = arith.addi %33, %36 : vector<8x128xi32>
    %cst_12 = arith.constant 3.200000e+00 : f32
    %38 = vector.broadcast %cst_12 : f32 to vector<8x128xf32>
    %39 = arith.cmpf oge, %38, %8 : vector<8x128xf32>
    %40 = arith.extui %39 : vector<8x128xi1> to vector<8x128xi32>
    %41 = arith.addi %37, %40 : vector<8x128xi32>
    %cst_13 = arith.constant 1.920000e+00 : f32
    %42 = vector.broadcast %cst_13 : f32 to vector<8x128xf32>
    %43 = arith.cmpf oge, %42, %8 : vector<8x128xf32>
    %44 = arith.extui %43 : vector<8x128xi1> to vector<8x128xi32>
    %45 = arith.addi %41, %44 : vector<8x128xi32>
    %cst_14 = arith.constant 0.959999978 : f32
    %46 = vector.broadcast %cst_14 : f32 to vector<8x128xf32>
    %47 = arith.cmpf oge, %46, %8 : vector<8x128xf32>
    %48 = arith.extui %47 : vector<8x128xi1> to vector<8x128xi32>
    %49 = arith.addi %45, %48 : vector<8x128xi32>
    %c1_i32 = arith.constant 1 : i32
    %50 = vector.broadcast %c1_i32 : i32 to vector<8x128xi32>
    %51 = arith.subi %49, %50 : vector<8x128xi32>
    %c0_i32_15 = arith.constant 0 : i32
    %c8_i32 = arith.constant 8 : i32
    %52 = vector.broadcast %c0_i32_15 : i32 to vector<8x128xi32>
    %53 = arith.maxsi %52, %51 : vector<8x128xi32>
    %54 = vector.broadcast %c8_i32 : i32 to vector<8x128xi32>
    %55 = arith.minsi %54, %53 : vector<8x128xi32>
    %cst_16 = arith.constant 0.000000e+00 : f32
    %56 = vector.broadcast %cst_16 : f32 to vector<8x128xf32>
    %cst_17 = arith.constant 0.000000e+00 : f32
    %57 = vector.broadcast %cst_17 : f32 to vector<8x128xf32>
    %c0_i32_18 = arith.constant 0 : i32
    %58 = vector.broadcast %c0_i32_18 : i32 to vector<8x128xi32>
    %59 = arith.cmpi eq, %55, %58 : vector<8x128xi32>
    %cst_19 = arith.constant 1.920000e+02 : f32
    %60 = vector.broadcast %cst_19 : f32 to vector<8x128xf32>
    %61 = arith.select %59, %60, %56 : vector<8x128xi1>, vector<8x128xf32>
    %cst_20 = arith.constant -0.010416667 : f32
    %62 = vector.broadcast %cst_20 : f32 to vector<8x128xf32>
    %63 = arith.select %59, %62, %57 : vector<8x128xi1>, vector<8x128xf32>
    %c1_i32_21 = arith.constant 1 : i32
    %64 = vector.broadcast %c1_i32_21 : i32 to vector<8x128xi32>
    %65 = arith.cmpi eq, %55, %64 : vector<8x128xi32>
    %cst_22 = arith.constant 9.600000e+01 : f32
    %66 = vector.broadcast %cst_22 : f32 to vector<8x128xf32>
    %67 = arith.select %65, %66, %61 : vector<8x128xi1>, vector<8x128xf32>
    %cst_23 = arith.constant -3.125000e-02 : f32
    %68 = vector.broadcast %cst_23 : f32 to vector<8x128xf32>
    %69 = arith.select %65, %68, %63 : vector<8x128xi1>, vector<8x128xf32>
    %c2_i32 = arith.constant 2 : i32
    %70 = vector.broadcast %c2_i32 : i32 to vector<8x128xi32>
    %71 = arith.cmpi eq, %55, %70 : vector<8x128xi32>
    %cst_24 = arith.constant 6.400000e+01 : f32
    %72 = vector.broadcast %cst_24 : f32 to vector<8x128xf32>
    %73 = arith.select %71, %72, %67 : vector<8x128xi1>, vector<8x128xf32>
    %cst_25 = arith.constant -6.250000e-02 : f32
    %74 = vector.broadcast %cst_25 : f32 to vector<8x128xf32>
    %75 = arith.select %71, %74, %69 : vector<8x128xi1>, vector<8x128xf32>
    %c3_i32 = arith.constant 3 : i32
    %76 = vector.broadcast %c3_i32 : i32 to vector<8x128xi32>
    %77 = arith.cmpi eq, %55, %76 : vector<8x128xi32>
    %cst_26 = arith.constant 4.800000e+01 : f32
    %78 = vector.broadcast %cst_26 : f32 to vector<8x128xf32>
    %79 = arith.select %77, %78, %73 : vector<8x128xi1>, vector<8x128xf32>
    %cst_27 = arith.constant -0.0347222239 : f32
    %80 = vector.broadcast %cst_27 : f32 to vector<8x128xf32>
    %81 = arith.select %77, %80, %75 : vector<8x128xi1>, vector<8x128xf32>
    %c4_i32 = arith.constant 4 : i32
    %82 = vector.broadcast %c4_i32 : i32 to vector<8x128xi32>
    %83 = arith.cmpi eq, %55, %82 : vector<8x128xi32>
    %cst_28 = arith.constant 1.920000e+01 : f32
    %84 = vector.broadcast %cst_28 : f32 to vector<8x128xf32>
    %85 = arith.select %83, %84, %79 : vector<8x128xi1>, vector<8x128xf32>
    %cst_29 = arith.constant -0.104166664 : f32
    %86 = vector.broadcast %cst_29 : f32 to vector<8x128xf32>
    %87 = arith.select %83, %86, %81 : vector<8x128xi1>, vector<8x128xf32>
    %c5_i32 = arith.constant 5 : i32
    %88 = vector.broadcast %c5_i32 : i32 to vector<8x128xi32>
    %89 = arith.cmpi eq, %55, %88 : vector<8x128xi32>
    %cst_30 = arith.constant 9.600000e+00 : f32
    %90 = vector.broadcast %cst_30 : f32 to vector<8x128xf32>
    %91 = arith.select %89, %90, %85 : vector<8x128xi1>, vector<8x128xf32>
    %cst_31 = arith.constant -0.208333328 : f32
    %92 = vector.broadcast %cst_31 : f32 to vector<8x128xf32>
    %93 = arith.select %89, %92, %87 : vector<8x128xi1>, vector<8x128xf32>
    %c6_i32 = arith.constant 6 : i32
    %94 = vector.broadcast %c6_i32 : i32 to vector<8x128xi32>
    %95 = arith.cmpi eq, %55, %94 : vector<8x128xi32>
    %cst_32 = arith.constant 4.800000e+00 : f32
    %96 = vector.broadcast %cst_32 : f32 to vector<8x128xf32>
    %97 = arith.select %95, %96, %91 : vector<8x128xi1>, vector<8x128xf32>
    %cst_33 = arith.constant -6.250000e-01 : f32
    %98 = vector.broadcast %cst_33 : f32 to vector<8x128xf32>
    %99 = arith.select %95, %98, %93 : vector<8x128xi1>, vector<8x128xf32>
    %c7_i32 = arith.constant 7 : i32
    %100 = vector.broadcast %c7_i32 : i32 to vector<8x128xi32>
    %101 = arith.cmpi eq, %55, %100 : vector<8x128xi32>
    %cst_34 = arith.constant 3.200000e+00 : f32
    %102 = vector.broadcast %cst_34 : f32 to vector<8x128xf32>
    %103 = arith.select %101, %102, %97 : vector<8x128xi1>, vector<8x128xf32>
    %cst_35 = arith.constant -7.812500e-01 : f32
    %104 = vector.broadcast %cst_35 : f32 to vector<8x128xf32>
    %105 = arith.select %101, %104, %99 : vector<8x128xi1>, vector<8x128xf32>
    %c8_i32_36 = arith.constant 8 : i32
    %106 = vector.broadcast %c8_i32_36 : i32 to vector<8x128xi32>
    %107 = arith.cmpi eq, %55, %106 : vector<8x128xi32>
    %cst_37 = arith.constant 1.920000e+00 : f32
    %108 = vector.broadcast %cst_37 : f32 to vector<8x128xf32>
    %109 = arith.select %107, %108, %103 : vector<8x128xi1>, vector<8x128xf32>
    %cst_38 = arith.constant -1.04166663 : f32
    %110 = vector.broadcast %cst_38 : f32 to vector<8x128xf32>
    %111 = arith.select %107, %110, %105 : vector<8x128xi1>, vector<8x128xf32>
    %112 = arith.subf %8, %109 : vector<8x128xf32>
    %113 = arith.mulf %112, %111 : vector<8x128xf32>
    %cst_39 = arith.constant 0.000000e+00 : f32
    %114 = vector.broadcast %cst_39 : f32 to vector<8x128xf32>
    %c0_40 = arith.constant 0 : index
    %c0_41 = arith.constant 0 : index
    %c0_42 = arith.constant 0 : index
    %c0_43 = arith.constant 0 : index
    %115 = vector.load %arg3[%c0_40, %c0_41, %c0_42, %c0_43] : memref<1x10x8x128xf32, #tpu.memory_space<vmem>>, vector<1x1x8x128xf32>
    %116 = vector.shape_cast %115 : vector<1x1x8x128xf32> to vector<8x128xf32>
    %cst_44 = arith.constant 1.000000e+00 : f32
    %117 = vector.broadcast %cst_44 : f32 to vector<8x128xf32>
    %118 = arith.subf %117, %116 : vector<8x128xf32>
    %119 = math.log %118 : vector<8x128xf32>
    %cst_45 = arith.constant -1.000000e+02 : f32
    %120 = vector.broadcast %cst_45 : f32 to vector<8x128xf32>
    %121 = arith.maximumf %119, %120 : vector<8x128xf32>
    %122 = arith.addf %114, %121 : vector<8x128xf32>
    %c0_i32_46 = arith.constant 0 : i32
    %123 = vector.broadcast %c0_i32_46 : i32 to vector<8x128xi32>
    %124 = arith.cmpi eq, %55, %123 : vector<8x128xi32>
    %125 = arith.select %124, %116, %114 : vector<8x128xi1>, vector<8x128xf32>
    %126 = arith.select %124, %121, %114 : vector<8x128xi1>, vector<8x128xf32>
    %c0_47 = arith.constant 0 : index
    %c1 = arith.constant 1 : index
    %c0_48 = arith.constant 0 : index
    %c0_49 = arith.constant 0 : index
    %127 = vector.load %arg3[%c0_47, %c1, %c0_48, %c0_49] : memref<1x10x8x128xf32, #tpu.memory_space<vmem>>, vector<1x1x8x128xf32>
    %128 = vector.shape_cast %127 : vector<1x1x8x128xf32> to vector<8x128xf32>
    %cst_50 = arith.constant 1.000000e+00 : f32
    %129 = vector.broadcast %cst_50 : f32 to vector<8x128xf32>
    %130 = arith.subf %129, %128 : vector<8x128xf32>
    %131 = math.log %130 : vector<8x128xf32>
    %cst_51 = arith.constant -1.000000e+02 : f32
    %132 = vector.broadcast %cst_51 : f32 to vector<8x128xf32>
    %133 = arith.maximumf %131, %132 : vector<8x128xf32>
    %134 = arith.addf %122, %133 : vector<8x128xf32>
    %135 = arith.select %124, %128, %114 : vector<8x128xi1>, vector<8x128xf32>
    %136 = arith.select %124, %133, %114 : vector<8x128xi1>, vector<8x128xf32>
    %c1_i32_52 = arith.constant 1 : i32
    %137 = vector.broadcast %c1_i32_52 : i32 to vector<8x128xi32>
    %138 = arith.cmpi eq, %55, %137 : vector<8x128xi32>
    %139 = arith.select %138, %128, %125 : vector<8x128xi1>, vector<8x128xf32>
    %140 = arith.select %138, %133, %126 : vector<8x128xi1>, vector<8x128xf32>
    %c0_53 = arith.constant 0 : index
    %c2 = arith.constant 2 : index
    %c0_54 = arith.constant 0 : index
    %c0_55 = arith.constant 0 : index
    %141 = vector.load %arg3[%c0_53, %c2, %c0_54, %c0_55] : memref<1x10x8x128xf32, #tpu.memory_space<vmem>>, vector<1x1x8x128xf32>
    %142 = vector.shape_cast %141 : vector<1x1x8x128xf32> to vector<8x128xf32>
    %cst_56 = arith.constant 1.000000e+00 : f32
    %143 = vector.broadcast %cst_56 : f32 to vector<8x128xf32>
    %144 = arith.subf %143, %142 : vector<8x128xf32>
    %145 = math.log %144 : vector<8x128xf32>
    %cst_57 = arith.constant -1.000000e+02 : f32
    %146 = vector.broadcast %cst_57 : f32 to vector<8x128xf32>
    %147 = arith.maximumf %145, %146 : vector<8x128xf32>
    %148 = arith.addf %134, %147 : vector<8x128xf32>
    %149 = arith.select %138, %142, %135 : vector<8x128xi1>, vector<8x128xf32>
    %150 = arith.select %138, %147, %136 : vector<8x128xi1>, vector<8x128xf32>
    %c2_i32_58 = arith.constant 2 : i32
    %151 = vector.broadcast %c2_i32_58 : i32 to vector<8x128xi32>
    %152 = arith.cmpi eq, %55, %151 : vector<8x128xi32>
    %153 = arith.select %152, %142, %139 : vector<8x128xi1>, vector<8x128xf32>
    %154 = arith.select %152, %147, %140 : vector<8x128xi1>, vector<8x128xf32>
    %c0_59 = arith.constant 0 : index
    %c3 = arith.constant 3 : index
    %c0_60 = arith.constant 0 : index
    %c0_61 = arith.constant 0 : index
    %155 = vector.load %arg3[%c0_59, %c3, %c0_60, %c0_61] : memref<1x10x8x128xf32, #tpu.memory_space<vmem>>, vector<1x1x8x128xf32>
    %156 = vector.shape_cast %155 : vector<1x1x8x128xf32> to vector<8x128xf32>
    %cst_62 = arith.constant 1.000000e+00 : f32
    %157 = vector.broadcast %cst_62 : f32 to vector<8x128xf32>
    %158 = arith.subf %157, %156 : vector<8x128xf32>
    %159 = math.log %158 : vector<8x128xf32>
    %cst_63 = arith.constant -1.000000e+02 : f32
    %160 = vector.broadcast %cst_63 : f32 to vector<8x128xf32>
    %161 = arith.maximumf %159, %160 : vector<8x128xf32>
    %162 = arith.addf %148, %161 : vector<8x128xf32>
    %163 = arith.select %152, %156, %149 : vector<8x128xi1>, vector<8x128xf32>
    %164 = arith.select %152, %161, %150 : vector<8x128xi1>, vector<8x128xf32>
    %c3_i32_64 = arith.constant 3 : i32
    %165 = vector.broadcast %c3_i32_64 : i32 to vector<8x128xi32>
    %166 = arith.cmpi eq, %55, %165 : vector<8x128xi32>
    %167 = arith.select %166, %156, %153 : vector<8x128xi1>, vector<8x128xf32>
    %168 = arith.select %166, %161, %154 : vector<8x128xi1>, vector<8x128xf32>
    %c0_65 = arith.constant 0 : index
    %c4 = arith.constant 4 : index
    %c0_66 = arith.constant 0 : index
    %c0_67 = arith.constant 0 : index
    %169 = vector.load %arg3[%c0_65, %c4, %c0_66, %c0_67] : memref<1x10x8x128xf32, #tpu.memory_space<vmem>>, vector<1x1x8x128xf32>
    %170 = vector.shape_cast %169 : vector<1x1x8x128xf32> to vector<8x128xf32>
    %cst_68 = arith.constant 1.000000e+00 : f32
    %171 = vector.broadcast %cst_68 : f32 to vector<8x128xf32>
    %172 = arith.subf %171, %170 : vector<8x128xf32>
    %173 = math.log %172 : vector<8x128xf32>
    %cst_69 = arith.constant -1.000000e+02 : f32
    %174 = vector.broadcast %cst_69 : f32 to vector<8x128xf32>
    %175 = arith.maximumf %173, %174 : vector<8x128xf32>
    %176 = arith.addf %162, %175 : vector<8x128xf32>
    %177 = arith.select %166, %170, %163 : vector<8x128xi1>, vector<8x128xf32>
    %178 = arith.select %166, %175, %164 : vector<8x128xi1>, vector<8x128xf32>
    %c4_i32_70 = arith.constant 4 : i32
    %179 = vector.broadcast %c4_i32_70 : i32 to vector<8x128xi32>
    %180 = arith.cmpi eq, %55, %179 : vector<8x128xi32>
    %181 = arith.select %180, %170, %167 : vector<8x128xi1>, vector<8x128xf32>
    %182 = arith.select %180, %175, %168 : vector<8x128xi1>, vector<8x128xf32>
    %c0_71 = arith.constant 0 : index
    %c5 = arith.constant 5 : index
    %c0_72 = arith.constant 0 : index
    %c0_73 = arith.constant 0 : index
    %183 = vector.load %arg3[%c0_71, %c5, %c0_72, %c0_73] : memref<1x10x8x128xf32, #tpu.memory_space<vmem>>, vector<1x1x8x128xf32>
    %184 = vector.shape_cast %183 : vector<1x1x8x128xf32> to vector<8x128xf32>
    %cst_74 = arith.constant 1.000000e+00 : f32
    %185 = vector.broadcast %cst_74 : f32 to vector<8x128xf32>
    %186 = arith.subf %185, %184 : vector<8x128xf32>
    %187 = math.log %186 : vector<8x128xf32>
    %cst_75 = arith.constant -1.000000e+02 : f32
    %188 = vector.broadcast %cst_75 : f32 to vector<8x128xf32>
    %189 = arith.maximumf %187, %188 : vector<8x128xf32>
    %190 = arith.addf %176, %189 : vector<8x128xf32>
    %191 = arith.select %180, %184, %177 : vector<8x128xi1>, vector<8x128xf32>
    %192 = arith.select %180, %189, %178 : vector<8x128xi1>, vector<8x128xf32>
    %c5_i32_76 = arith.constant 5 : i32
    %193 = vector.broadcast %c5_i32_76 : i32 to vector<8x128xi32>
    %194 = arith.cmpi eq, %55, %193 : vector<8x128xi32>
    %195 = arith.select %194, %184, %181 : vector<8x128xi1>, vector<8x128xf32>
    %196 = arith.select %194, %189, %182 : vector<8x128xi1>, vector<8x128xf32>
    %c0_77 = arith.constant 0 : index
    %c6 = arith.constant 6 : index
    %c0_78 = arith.constant 0 : index
    %c0_79 = arith.constant 0 : index
    %197 = vector.load %arg3[%c0_77, %c6, %c0_78, %c0_79] : memref<1x10x8x128xf32, #tpu.memory_space<vmem>>, vector<1x1x8x128xf32>
    %198 = vector.shape_cast %197 : vector<1x1x8x128xf32> to vector<8x128xf32>
    %cst_80 = arith.constant 1.000000e+00 : f32
    %199 = vector.broadcast %cst_80 : f32 to vector<8x128xf32>
    %200 = arith.subf %199, %198 : vector<8x128xf32>
    %201 = math.log %200 : vector<8x128xf32>
    %cst_81 = arith.constant -1.000000e+02 : f32
    %202 = vector.broadcast %cst_81 : f32 to vector<8x128xf32>
    %203 = arith.maximumf %201, %202 : vector<8x128xf32>
    %204 = arith.addf %190, %203 : vector<8x128xf32>
    %205 = arith.select %194, %198, %191 : vector<8x128xi1>, vector<8x128xf32>
    %206 = arith.select %194, %203, %192 : vector<8x128xi1>, vector<8x128xf32>
    %c6_i32_82 = arith.constant 6 : i32
    %207 = vector.broadcast %c6_i32_82 : i32 to vector<8x128xi32>
    %208 = arith.cmpi eq, %55, %207 : vector<8x128xi32>
    %209 = arith.select %208, %198, %195 : vector<8x128xi1>, vector<8x128xf32>
    %210 = arith.select %208, %203, %196 : vector<8x128xi1>, vector<8x128xf32>
    %c0_83 = arith.constant 0 : index
    %c7 = arith.constant 7 : index
    %c0_84 = arith.constant 0 : index
    %c0_85 = arith.constant 0 : index
    %211 = vector.load %arg3[%c0_83, %c7, %c0_84, %c0_85] : memref<1x10x8x128xf32, #tpu.memory_space<vmem>>, vector<1x1x8x128xf32>
    %212 = vector.shape_cast %211 : vector<1x1x8x128xf32> to vector<8x128xf32>
    %cst_86 = arith.constant 1.000000e+00 : f32
    %213 = vector.broadcast %cst_86 : f32 to vector<8x128xf32>
    %214 = arith.subf %213, %212 : vector<8x128xf32>
    %215 = math.log %214 : vector<8x128xf32>
    %cst_87 = arith.constant -1.000000e+02 : f32
    %216 = vector.broadcast %cst_87 : f32 to vector<8x128xf32>
    %217 = arith.maximumf %215, %216 : vector<8x128xf32>
    %218 = arith.addf %204, %217 : vector<8x128xf32>
    %219 = arith.select %208, %212, %205 : vector<8x128xi1>, vector<8x128xf32>
    %220 = arith.select %208, %217, %206 : vector<8x128xi1>, vector<8x128xf32>
    %c7_i32_88 = arith.constant 7 : i32
    %221 = vector.broadcast %c7_i32_88 : i32 to vector<8x128xi32>
    %222 = arith.cmpi eq, %55, %221 : vector<8x128xi32>
    %223 = arith.select %222, %212, %209 : vector<8x128xi1>, vector<8x128xf32>
    %224 = arith.select %222, %217, %210 : vector<8x128xi1>, vector<8x128xf32>
    %c0_89 = arith.constant 0 : index
    %c8 = arith.constant 8 : index
    %c0_90 = arith.constant 0 : index
    %c0_91 = arith.constant 0 : index
    %225 = vector.load %arg3[%c0_89, %c8, %c0_90, %c0_91] : memref<1x10x8x128xf32, #tpu.memory_space<vmem>>, vector<1x1x8x128xf32>
    %226 = vector.shape_cast %225 : vector<1x1x8x128xf32> to vector<8x128xf32>
    %cst_92 = arith.constant 1.000000e+00 : f32
    %227 = vector.broadcast %cst_92 : f32 to vector<8x128xf32>
    %228 = arith.subf %227, %226 : vector<8x128xf32>
    %229 = math.log %228 : vector<8x128xf32>
    %cst_93 = arith.constant -1.000000e+02 : f32
    %230 = vector.broadcast %cst_93 : f32 to vector<8x128xf32>
    %231 = arith.maximumf %229, %230 : vector<8x128xf32>
    %232 = arith.addf %218, %231 : vector<8x128xf32>
    %233 = arith.select %222, %226, %219 : vector<8x128xi1>, vector<8x128xf32>
    %234 = arith.select %222, %231, %220 : vector<8x128xi1>, vector<8x128xf32>
    %c8_i32_94 = arith.constant 8 : i32
    %235 = vector.broadcast %c8_i32_94 : i32 to vector<8x128xi32>
    %236 = arith.cmpi eq, %55, %235 : vector<8x128xi32>
    %237 = arith.select %236, %226, %223 : vector<8x128xi1>, vector<8x128xf32>
    %238 = arith.select %236, %231, %224 : vector<8x128xi1>, vector<8x128xf32>
    %c0_95 = arith.constant 0 : index
    %c9 = arith.constant 9 : index
    %c0_96 = arith.constant 0 : index
    %c0_97 = arith.constant 0 : index
    %239 = vector.load %arg3[%c0_95, %c9, %c0_96, %c0_97] : memref<1x10x8x128xf32, #tpu.memory_space<vmem>>, vector<1x1x8x128xf32>
    %240 = vector.shape_cast %239 : vector<1x1x8x128xf32> to vector<8x128xf32>
    %cst_98 = arith.constant 1.000000e+00 : f32
    %241 = vector.broadcast %cst_98 : f32 to vector<8x128xf32>
    %242 = arith.subf %241, %240 : vector<8x128xf32>
    %243 = math.log %242 : vector<8x128xf32>
    %cst_99 = arith.constant -1.000000e+02 : f32
    %244 = vector.broadcast %cst_99 : f32 to vector<8x128xf32>
    %245 = arith.maximumf %243, %244 : vector<8x128xf32>
    %246 = arith.addf %232, %245 : vector<8x128xf32>
    %247 = arith.select %236, %240, %233 : vector<8x128xi1>, vector<8x128xf32>
    %248 = arith.select %236, %245, %234 : vector<8x128xi1>, vector<8x128xf32>
    %249 = math.log %237 : vector<8x128xf32>
    %cst_100 = arith.constant -1.000000e+02 : f32
    %250 = vector.broadcast %cst_100 : f32 to vector<8x128xf32>
    %251 = arith.maximumf %249, %250 : vector<8x128xf32>
    %252 = math.log %247 : vector<8x128xf32>
    %cst_101 = arith.constant -1.000000e+02 : f32
    %253 = vector.broadcast %cst_101 : f32 to vector<8x128xf32>
    %254 = arith.maximumf %252, %253 : vector<8x128xf32>
    %cst_102 = arith.constant 1.000000e+00 : f32
    %255 = vector.broadcast %cst_102 : f32 to vector<8x128xf32>
    %256 = arith.subf %255, %113 : vector<8x128xf32>
    %257 = arith.subf %251, %238 : vector<8x128xf32>
    %258 = arith.mulf %256, %257 : vector<8x128xf32>
    %259 = arith.addf %246, %258 : vector<8x128xf32>
    %260 = arith.subf %254, %248 : vector<8x128xf32>
    %261 = arith.mulf %113, %260 : vector<8x128xf32>
    %262 = arith.addf %259, %261 : vector<8x128xf32>
    %cst_103 = arith.constant 0.000000e+00 : f32
    %263 = vector.broadcast %cst_103 : f32 to vector<8x128xf32>
    %264 = arith.subf %263, %262 : vector<8x128xf32>
    %265 = tpu.iota {dimensions = array<i32: 0>} : vector<8x128xi32>
    %266 = tpu.iota {dimensions = array<i32: 1>} : vector<8x128xi32>
    %c1_i32_104 = arith.constant 1 : i32
    %267 = arith.muli %arg1, %c1_i32_104 : i32
    %268 = arith.addi %267, %arg2 : i32
    %c128_i32 = arith.constant 128 : i32
    %269 = arith.muli %268, %c128_i32 : i32
    %270 = vector.broadcast %269 : i32 to vector<8x128xi32>
    %271 = arith.addi %270, %266 : vector<8x128xi32>
    %c256_i32 = arith.constant 256 : i32
    %272 = vector.broadcast %c256_i32 : i32 to vector<8x128xi32>
    %273 = arith.muli %265, %272 : vector<8x128xi32>
    %274 = arith.addi %273, %271 : vector<8x128xi32>
    %c256_i32_105 = arith.constant 256 : i32
    %275 = vector.broadcast %c256_i32_105 : i32 to vector<8x128xi32>
    %276 = arith.cmpi slt, %274, %275 : vector<8x128xi32>
    %cst_106 = arith.constant 0.000000e+00 : f32
    %277 = vector.broadcast %cst_106 : f32 to vector<8x128xf32>
    %278 = arith.select %276, %264, %277 : vector<8x128xi1>, vector<8x128xf32>
    %c0_107 = arith.constant 0 : index
    %c0_108 = arith.constant 0 : index
    %279 = vector.load %arg6[%c0_107, %c0_108] : memref<8x128xf32, #tpu.memory_space<vmem>>, vector<8x128xf32>
    %280 = arith.addf %279, %278 : vector<8x128xf32>
    %c0_109 = arith.constant 0 : index
    %c0_110 = arith.constant 0 : index
    %281 = vector.load %arg6[%c0_109, %c0_110] : memref<8x128xf32, #tpu.memory_space<vmem>>, vector<8x128xf32>
    tpu.vector_store %arg6[%c0_109, %c0_110], %280 {strides = array<i32>} : memref<8x128xf32, #tpu.memory_space<vmem>>, vector<8x128xf32>,
    %c0_i32_111 = arith.constant 0 : i32
    %282 = arith.cmpi eq, %arg2, %c0_i32_111 : i32
    %283 = arith.extui %282 : i1 to i32
    %c0_i32_112 = arith.constant 0 : i32
    %284 = arith.cmpi ne, %283, %c0_i32_112 : i32
    scf.if %284 {
      %c0_113 = arith.constant 0 : index
      %c0_114 = arith.constant 0 : index
      %285 = vector.load %arg6[%c0_113, %c0_114] : memref<8x128xf32, #tpu.memory_space<vmem>>, vector<8x128xf32>
      %c0_115 = arith.constant 0 : index
      %c0_116 = arith.constant 0 : index
      %c0_117 = arith.constant 0 : index
      %c0_118 = arith.constant 0 : index
      %286 = vector.load %arg5[%c0_115, %c0_116, %c0_117, %c0_118] : memref<1x1x8x128xf32, #tpu.memory_space<vmem>>, vector<1x1x8x128xf32>
      %287 = vector.shape_cast %286 : vector<1x1x8x128xf32> to vector<8x128xf32>
      %288 = vector.shape_cast %285 : vector<8x128xf32> to vector<1x1x8x128xf32>
      tpu.vector_store %arg5[%c0_115, %c0_116, %c0_117, %c0_118], %288 {strides = array<i32>} : memref<1x1x8x128xf32, #tpu.memory_space<vmem>>, vector<1x1x8x128xf32>,
    } else {
    }
    return
  }
  func.func @transform_0(%arg0: i32, %arg1: i32, %arg2: i32) -> (i32, i32, i32, i32) {
    %c1_i32 = arith.constant 1 : i32
    %0 = arith.muli %arg1, %c1_i32 : i32
    %1 = arith.addi %0, %arg2 : i32
    %c0_i32 = arith.constant 0 : i32
    %c0_i32_0 = arith.constant 0 : i32
    %c0_i32_1 = arith.constant 0 : i32
    return %arg0, %c0_i32, %c0_i32_0, %1 : i32, i32, i32, i32
  }
  func.func @transform_1(%arg0: i32, %arg1: i32, %arg2: i32) -> (i32, i32, i32) {
    %c1_i32 = arith.constant 1 : i32
    %0 = arith.muli %arg1, %c1_i32 : i32
    %1 = arith.addi %0, %arg2 : i32
    %c0_i32 = arith.constant 0 : i32
    %c0_i32_0 = arith.constant 0 : i32
    return %arg0, %c0_i32, %1 : i32, i32, i32
  }
  func.func @transform_2(%arg0: i32, %arg1: i32, %arg2: i32) -> (i32, i32, i32, i32) {
    %c0_i32 = arith.constant 0 : i32
    %c0_i32_0 = arith.constant 0 : i32
    %c0_i32_1 = arith.constant 0 : i32
    return %arg0, %arg1, %c0_i32, %c0_i32_0 : i32, i32, i32, i32
  }
}

</mosaic_0001>

<llo_original>
// kernel: tpu_custom_call.1
$region0: #{tpu_custom_call.1}
  #allocation0 [shape = 'u32[]', space=smem, size = 0x4, offset = 0x4, fixed_abs, tag = 'smem constant byte address 0x4 - core index']
  #allocation1 [shape = 'u32[144,128]{1,0:T(1,128)}', space=vmem, size = 0x12000, scoped, tag = 'internal scratch']
  #allocation2 [shape = 'f32[8,128]{1,0:T(8,128)}', space=vmem, size = 0x1000, scoped, tag = 'scratch operand']
  %s0 = inlined_call_operand.hbm [shape: f32[2,10,8,256], index: 0, kind: input, shape index: {}]
  %s1 = inlined_call_operand.hbm [shape: f32[2,8,256], index: 1, kind: input, shape index: {}]
  %s2 = inlined_call_operand.hbm [shape: f32[2,2,8,128], index: 2, kind: output, shape index: {}]
  %s3 = sld [smem:[#allocation0]]
  $region57: #{tpu_custom_call.1} parent=0
    _
  %s5 = ssub.s32 1, %s3
  %s6 = scalar_select 0, %s5, %s3
  $region1: #{tpu_custom_call.1} parent=0
    #allocation3 [shape = 'u8[81920]{0}', space=vmem, size = 0x14000, scoped, tag = 'input window, operand 0']
    #allocation4 [shape = 's32[2]{0}', space=sflag, size = 0x8, scoped, tag = 'scoped memory for tpu_custom_call.1']
    #allocation5 [shape = 's32[2]{0}', space=sflag, size = 0x8, scoped, tag = 'scoped memory for tpu_custom_call.1']
    #allocation6 [shape = 'u8[8192]{0}', space=vmem, size = 0x2000, scoped, tag = 'input window, operand 1']
    #allocation7 [shape = 's32[2]{0}', space=sflag, size = 0x8, scoped, tag = 'scoped memory for tpu_custom_call.1']
    #allocation8 [shape = 'u8[8192]{0}', space=vmem, size = 0x2000, scoped, tag = 'output window, operand 0']
    %7 = vsyncpa [#allocation4], 0
    %s8 = scalar_lea.sflag [#allocation4], 1
    %9 = vsyncpa %s8, 0
    %10 = vsyncpa [#allocation7], 0
    %s11 = scalar_lea.sflag [#allocation7], 1
    %12 = vsyncpa %s11, 0
    %13 = vsyncpa [#allocation5], 0
    %s14 = scalar_lea.sflag [#allocation5], 1
    %15 = vsyncpa %s14, 0
    loop: start=0, step=1, limit=6
    $region2: #{tpu_custom_call.1} parent=1 // loop_pre_header
      _
    $region3: #{tpu_custom_call.1} parent=1 // loop_header
      %s17 = sphi 0, %s21
      %p18 = scmp.ge.s32.totalorder %s17, 6
      %s24 = sphi 0, %s43
      %s25 = sphi 0, %s39
      %s26 = sphi 0, %s35
      %s27 = sphi 0, %s24
      %s28 = sphi 0, %s25
      %s29 = sphi 0, %s26
      %s30 = sphi 0, %s27
      %s31 = sphi 0, %s28
      %s32 = sphi 0, %s29
      %s50 = sphi 0, %s52
      %s53 = sphi 0, %s50
      %s54 = sphi 0, %s53
      %s70 = sphi 0, %s54
      %s80 = sphi 0, %s82
      %s83 = sphi 0, %s80
      %s84 = sphi 0, %s83
      %s100 = sphi 0, %s84
      %s108 = sphi 0, %s110
      %s111 = sphi 0, %s108
      %s112 = sphi 0, %s111
      %s128 = sphi 0, %s112
    $region4: #{tpu_custom_call.1} parent=1 // loop_header_branch
      %20 = sbr.rel (%p18) target = $region8
    $region5: #{tpu_custom_call.1} parent=1 // loop_body
      %s22 = ssub.s32 %s17, 1
      %s23 = ssub.s32 %s17, 2
      %s33 = sadd.s32 1, %s26
      %p34 = scmp.ge.s32.totalorder %s33, 1
      %s35 = scalar_select %p34, 0, %s33
      %s36 = sadd.s32 1, %s25
      %s37 = scalar_select %p34, %s36, %s25
      %p38 = scmp.ge.s32.totalorder %s37, 2
      %s39 = scalar_select %p38, 0, %s37
      %s40 = sadd.s32 1, %s24
      %s41 = scalar_select %p38, %s40, %s24
      %p42 = scmp.ge.s32.totalorder %s41, 2
      %s43 = scalar_select %p42, 0, %s41
      %s44 = sadd.s32 %s25, %s26
      %s45 = sadd.s32 %s39, %s35
      %s46 = ssub.s32 %s24, %s43
      %s47 = ssub.s32 %s44, %s45
      %s48 = sor.u32 %s46, %s47
      %p49 = scmp.eq.s32.totalorder %s48, 0
      %s51 = sadd.s32 %s50, 1
      %s52 = scalar_select %p49, %s50, %s51
      %p55 = pneg %p49
      %p56 = scmp.eq.s32.totalorder %s17, 3
      %p57 = por %p55, %p56
      %p58 = scmp.ne.s32.totalorder %s50, %s53
      %p59 = scmp.eq.s32.totalorder %s17, 0
      %p60 = por %p58, %p59
      %p61 = scmp.ne.s32.totalorder %s50, %s53
      %p62 = scmp.eq.s32.totalorder %s22, 3
      %p63 = por %p61, %p62
      %p64 = scmp.ne.s32.totalorder %s53, %s54
      %p65 = scmp.eq.s32.totalorder %s22, 0
      %p66 = por %p64, %p65
      %p67 = scmp.ne.s32.totalorder %s53, %s54
      %p68 = scmp.eq.s32.totalorder %s23, 3
      %p69 = por %p67, %p68
      %p71 = scmp.ne.s32.totalorder %s54, %s70
      %p72 = scmp.eq.s32.totalorder %s23, 0
      %p73 = por %p71, %p72
      %s74 = sadd.s32 %s25, %s26
      %s75 = sadd.s32 %s39, %s35
      %s76 = ssub.s32 %s24, %s43
      %s77 = ssub.s32 %s74, %s75
      %s78 = sor.u32 %s76, %s77
      %p79 = scmp.eq.s32.totalorder %s78, 0
      %s81 = sadd.s32 %s80, 1
      %s82 = scalar_select %p79, %s80, %s81
      %p85 = pneg %p79
      %p86 = scmp.eq.s32.totalorder %s17, 3
      %p87 = por %p85, %p86
      %p88 = scmp.ne.s32.totalorder %s80, %s83
      %p89 = scmp.eq.s32.totalorder %s17, 0
      %p90 = por %p88, %p89
      %p91 = scmp.ne.s32.totalorder %s80, %s83
      %p92 = scmp.eq.s32.totalorder %s22, 3
      %p93 = por %p91, %p92
      %p94 = scmp.ne.s32.totalorder %s83, %s84
      %p95 = scmp.eq.s32.totalorder %s22, 0
      %p96 = por %p94, %p95
      %p97 = scmp.ne.s32.totalorder %s83, %s84
      %p98 = scmp.eq.s32.totalorder %s23, 3
      %p99 = por %p97, %p98
      %p101 = scmp.ne.s32.totalorder %s84, %s100
      %p102 = scmp.eq.s32.totalorder %s23, 0
      %p103 = por %p101, %p102
      %s104 = ssub.s32 %s24, %s43
      %s105 = ssub.s32 %s25, %s39
      %s106 = sor.u32 %s104, %s105
      %p107 = scmp.eq.s32.totalorder %s106, 0
      %s109 = sadd.s32 %s108, 1
      %s110 = scalar_select %p107, %s108, %s109
      %p113 = pneg %p107
      %p114 = scmp.eq.s32.totalorder %s17, 3
      %p115 = por %p113, %p114
      %p116 = scmp.ne.s32.totalorder %s108, %s111
      %p117 = scmp.eq.s32.totalorder %s17, 0
      %p118 = por %p116, %p117
      %p119 = scmp.ne.s32.totalorder %s108, %s111
      %p120 = scmp.eq.s32.totalorder %s22, 3
      %p121 = por %p119, %p120
      %p122 = scmp.ne.s32.totalorder %s111, %s112
      %p123 = scmp.eq.s32.totalorder %s22, 0
      %p124 = por %p122, %p123
      %p125 = scmp.ne.s32.totalorder %s111, %s112
      %p126 = scmp.eq.s32.totalorder %s23, 3
      %p127 = por %p125, %p126
      %p129 = scmp.ne.s32.totalorder %s112, %s128
      %p130 = scmp.eq.s32.totalorder %s23, 0
      %p131 = por %p129, %p130
      %p132 = scmp.le.s32.totalorder 1, %s17
      %p133 = scmp.lt.s32.totalorder %s17, 5
      %p134 = pnand %p132, %p133
      %p135 = pneg %p134
      // Predicated region
      $region9: #{tpu_custom_call.1} parent=5 // pred_check
        _
      $region10: #{tpu_custom_call.1} parent=5 // pred_check_branch
        %137 = sbr.rel (%p134) target = $region12
      $region11: #{tpu_custom_call.1} parent=5 // pred_region
        %s138 = ssub.s32 %s17, 1
      $region12: #{tpu_custom_call.1} parent=5 // pred_fallthru
        _
      %p139 = scmp.lt.s32.totalorder %s17, 4
      // Predicated region
      $region13: #{tpu_custom_call.1} parent=5 // pred_check
        %p140 = pneg %p139
      $region14: #{tpu_custom_call.1} parent=5 // pred_check_branch
        %142 = sbr.rel (%p140) target = $region16
      $region15: #{tpu_custom_call.1} parent=5 // pred_region
        // Predicated region
        $region17: #{tpu_custom_call.1} parent=15 // pred_check
          %p143 = pneg %p60
        $region18: #{tpu_custom_call.1} parent=15 // pred_check_branch
          %145 = sbr.rel (%p143) target = $region20
        $region19: #{tpu_custom_call.1} parent=15 // pred_region
          %s146 = sand.u32 %s50, 1
          %s147 = scalar_lea.sflag [#allocation4], %s146
          %s148 = sand.u32 %s50, 1
          %s149 = smul.addr %s148, 80
          %s150 = scalar_lea.vmem [#allocation3], %s149
          %s151 = sadd.s32 %s25, %s26
          %s153 = ssub.s32 1280, 1280
          %154 = vsyncadd %s147, %s153
          %s155 = smul.addr %s24, 20
          %s156 = sadd.s32 %s151, %s155
          %s157 = smul.addr %s156, 128
          %s158 = scalar_lea.hbm %s0, %s157
          %s159 = sshll.u32 %s150, 4
          %s160 = int_to_ptr.vmem [resolvable:$true] %s159
          %165 = dma.hbm_to_vmem [thread:$0]  %s158, 1280, %s160, %s147, 256, 128, 8
        $region20: #{tpu_custom_call.1} parent=15 // pred_fallthru
          _
        // Predicated region
        $region21: #{tpu_custom_call.1} parent=15 // pred_check
          %p166 = pneg %p90
        $region22: #{tpu_custom_call.1} parent=15 // pred_check_branch
          %168 = sbr.rel (%p166) target = $region24
        $region23: #{tpu_custom_call.1} parent=15 // pred_region
          %s169 = sand.u32 %s80, 1
          %s170 = scalar_lea.sflag [#allocation7], %s169
          %s171 = sand.u32 %s80, 1
          %s172 = smul.addr %s171, 8
          %s173 = scalar_lea.vmem [#allocation6], %s172
          %s174 = sadd.s32 %s25, %s26
          %s176 = ssub.s32 128, 128
          %177 = vsyncadd %s170, %s176
          %s178 = smul.addr %s24, 2
          %s179 = sadd.s32 %s174, %s178
          %s180 = smul.addr %s179, 128
          %s181 = scalar_lea.hbm %s1, %s180
          %s183 = sshll.u32 %s173, 4
          %s184 = int_to_ptr.vmem [resolvable:$true] %s183
          %186 = dma.hbm_to_vmem [thread:$0]  %s181, 128, %s184, %s170
        $region24: #{tpu_custom_call.1} parent=15 // pred_fallthru
          _
      $region16: #{tpu_custom_call.1} parent=5 // pred_fallthru
        _
      %p187 = scmp.le.s32.totalorder 1, %s17
      %p188 = scmp.lt.s32.totalorder %s17, 5
      %p189 = pnand %p187, %p188
      %p190 = pneg %p189
      // Predicated region
      $region25: #{tpu_custom_call.1} parent=5 // pred_check
        _
      $region26: #{tpu_custom_call.1} parent=5 // pred_check_branch
        %192 = sbr.rel (%p189) target = $region28
      $region27: #{tpu_custom_call.1} parent=5 // pred_region
        %s193 = ssub.s32 %s17, 1
        %s194 = sand.u32 %s53, 1
        %s195 = scalar_lea.sflag [#allocation4], %s194
        %s196 = sand.u32 %s53, 1
        %s197 = smul.addr %s196, 80
        %s198 = scalar_lea.vmem [#allocation3], %s197
        // Predicated region
        $region29: #{tpu_custom_call.1} parent=27 // pred_check
          %p199 = pneg %p66
        $region30: #{tpu_custom_call.1} parent=27 // pred_check_branch
          %201 = sbr.rel (%p199) target = $region32
        $region31: #{tpu_custom_call.1} parent=27 // pred_region
          %202 = dma.done %s195, 1280
        $region32: #{tpu_custom_call.1} parent=27 // pred_fallthru
          _
        %s203 = sand.u32 %s83, 1
        %s204 = scalar_lea.sflag [#allocation7], %s203
        %s205 = sand.u32 %s83, 1
        %s206 = smul.addr %s205, 8
        %s207 = scalar_lea.vmem [#allocation6], %s206
        // Predicated region
        $region33: #{tpu_custom_call.1} parent=27 // pred_check
          %p208 = pneg %p96
        $region34: #{tpu_custom_call.1} parent=27 // pred_check_branch
          %210 = sbr.rel (%p208) target = $region36
        $region35: #{tpu_custom_call.1} parent=27 // pred_region
          %211 = dma.done %s204, 128
        $region36: #{tpu_custom_call.1} parent=27 // pred_fallthru
          _
        %s212 = sand.u32 %s53, 1
        %s213 = scalar_lea.sflag [#allocation4], %s212
        %s214 = sand.u32 %s53, 1
        %s215 = smul.addr %s214, 80
        %s216 = scalar_lea.vmem [#allocation3], %s215
        %p217 = pneg %p66
        %p218 = pneg %p63
        %s219 = sand.u32 %s83, 1
        %s220 = scalar_lea.sflag [#allocation7], %s219
        %s221 = sand.u32 %s83, 1
        %s222 = smul.addr %s221, 8
        %s223 = scalar_lea.vmem [#allocation6], %s222
        %p224 = pneg %p96
        %p225 = pneg %p93
        %p226 = pneg %p124
        %p227 = pneg %p121
        %s228 = sand.u32 %s111, 1
        %s229 = scalar_lea.sflag [#allocation5], %s228
        %s230 = sand.u32 %s111, 1
        %s231 = smul.addr %s230, 8
        %s232 = scalar_lea.vmem [#allocation8], %s231
        %s233 = sadd.s32 %s28, %s29
        %s234 = sadd.s32 %s28, %s29
        %p235 = scmp.eq.s32.totalorder %s29, 0
        // Predicated region
        $region37: #{tpu_custom_call.1} parent=27 // pred_check
          %p236 = pneg %p235
        $region38: #{tpu_custom_call.1} parent=27 // pred_check_branch
          %238 = sbr.rel (%p236) target = $region40
        $region39: #{tpu_custom_call.1} parent=27 // pred_region
          %239 = vst [vmem:[#allocation2] sm:$0xff] 0.0
        $region40: #{tpu_custom_call.1} parent=27 // pred_fallthru
          _
        %v240 = vld [vmem:[%s207] sm:$0xff]
        %v241 = vmax.f32 %v240, 0.96
        %v242 = vmin.f32 %v241, 192.0
        %vm243 = vcmp.ge.f32.partialorder 192.0, %v242
        %v244 = vsel %vm243, 1, 0
        %vm245 = vcmp.ge.f32.partialorder 96.0, %v242
        %v246 = vsel %vm245, 1, 0
        %v247 = vadd.s32 %v244, %v246
        %vm248 = vcmp.ge.f32.partialorder 64.0, %v242
        %v249 = vsel %vm248, 1, 0
        %v250 = vadd.s32 %v247, %v249
        %vm251 = vcmp.ge.f32.partialorder 48.0, %v242
        %v252 = vsel %vm251, 1, 0
        %v253 = vadd.s32 %v250, %v252
        %vm254 = vcmp.ge.f32.partialorder 19.2, %v242
        %v255 = vsel %vm254, 1, 0
        %v256 = vadd.s32 %v253, %v255
        %vm257 = vcmp.ge.f32.partialorder 9.6, %v242
        %v258 = vsel %vm257, 1, 0
        %v259 = vadd.s32 %v256, %v258
        %vm260 = vcmp.ge.f32.partialorder 4.8, %v242
        %v261 = vsel %vm260, 1, 0
        %v262 = vadd.s32 %v259, %v261
        %vm263 = vcmp.ge.f32.partialorder 3.2, %v242
        %v264 = vsel %vm263, 1, 0
        %v265 = vadd.s32 %v262, %v264
        %vm266 = vcmp.ge.f32.partialorder 1.92, %v242
        %v267 = vsel %vm266, 1, 0
        %v268 = vadd.s32 %v265, %v267
        %vm269 = vcmp.ge.f32.partialorder 0.96, %v242
        %v270 = vsel %vm269, 1, 0
        %v271 = vadd.s32 %v268, %v270
        %v272 = vsub.s32 %v271, 1
        %vm273 = vcmp.gt.s32.totalorder %v272, 0
        %v274 = vsel %vm273, %v272, 0
        %vm275 = vcmp.lt.s32.totalorder %v274, 8
        %v276 = vsel %vm275, %v274, 8
        %vm277 = vcmp.eq.s32.totalorder %v276, 0
        %v278 = vsel %vm277, 192.0, 0.0
        %v279 = vsel %vm277, -0.010416667, 0.0
        %vm280 = vcmp.eq.s32.totalorder %v276, 1
        %v281 = vsel %vm280, 96.0, %v278
        %v282 = vsel %vm280, -0.03125, %v279
        %vm283 = vcmp.eq.s32.totalorder %v276, 2
        %v284 = vsel %vm283, 64.0, %v281
        %v285 = vsel %vm283, -0.0625, %v282
        %vm286 = vcmp.eq.s32.totalorder %v276, 3
        %v287 = vsel %vm286, 48.0, %v284
        %v288 = vsel %vm286, -0.034722224, %v285
        %vm289 = vcmp.eq.s32.totalorder %v276, 4
        %v290 = vsel %vm289, 19.2, %v287
        %v291 = vsel %vm289, -0.104166664, %v288
        %vm292 = vcmp.eq.s32.totalorder %v276, 5
        %v293 = vsel %vm292, 9.6, %v290
        %v294 = vsel %vm292, -0.20833333, %v291
        %vm295 = vcmp.eq.s32.totalorder %v276, 6
        %v296 = vsel %vm295, 4.8, %v293
        %v297 = vsel %vm295, -0.625, %v294
        %vm298 = vcmp.eq.s32.totalorder %v276, 7
        %v299 = vsel %vm298, 3.2, %v296
        %v300 = vsel %vm298, -0.78125, %v297
        %vm301 = vcmp.eq.s32.totalorder %v276, 8
        %v302 = vsel %vm301, 1.92, %v299
        %v303 = vsel %vm301, -1.0416666, %v300
        %v304 = vsub.f32 %v242, %v302
        %v305 = vmul.f32 %v304, %v303
        %v306 = vld [vmem:[%s198] sm:$0xff]
        %v307 = vsub.f32 1.0, %v306
        %v308 = vlog2.pop %v307
        %v309 = vmul.f32 %v308, 0.6931472
        %v310 = vmax.f32 %v309, -100.0
        %v311 = vadd.f32 %v310, 0.0
        %v312 = vsel %vm277, %v306, 0.0
        %v313 = vsel %vm277, %v310, 0.0
        %s314 = scalar_lea.vmem %s198, 8 [#allocation3]
        %v315 = vld [vmem:[%s314] sm:$0xff]
        %v316 = vsub.f32 1.0, %v315
        %v317 = vlog2.pop %v316
        %v318 = vmul.f32 %v317, 0.6931472
        %v319 = vmax.f32 %v318, -100.0
        %v320 = vadd.f32 %v311, %v319
        %v321 = vsel %vm277, %v315, 0.0
        %v322 = vsel %vm277, %v319, 0.0
        %v323 = vsel %vm280, %v315, %v312
        %v324 = vsel %vm280, %v319, %v313
        %s325 = scalar_lea.vmem %s198, 16 [#allocation3]
        %v326 = vld [vmem:[%s325] sm:$0xff]
        %v327 = vsub.f32 1.0, %v326
        %v328 = vlog2.pop %v327
        %v329 = vmul.f32 %v328, 0.6931472
        %v330 = vmax.f32 %v329, -100.0
        %v331 = vadd.f32 %v320, %v330
        %v332 = vsel %vm280, %v326, %v321
        %v333 = vsel %vm280, %v330, %v322
        %v334 = vsel %vm283, %v326, %v323
        %v335 = vsel %vm283, %v330, %v324
        %s336 = scalar_lea.vmem %s198, 24 [#allocation3]
        %v337 = vld [vmem:[%s336] sm:$0xff]
        %v338 = vsub.f32 1.0, %v337
        %v339 = vlog2.pop %v338
        %v340 = vmul.f32 %v339, 0.6931472
        %v341 = vmax.f32 %v340, -100.0
        %v342 = vadd.f32 %v331, %v341
        %v343 = vsel %vm283, %v337, %v332
        %v344 = vsel %vm283, %v341, %v333
        %v345 = vsel %vm286, %v337, %v334
        %v346 = vsel %vm286, %v341, %v335
        %s347 = scalar_lea.vmem %s198, 32 [#allocation3]
        %v348 = vld [vmem:[%s347] sm:$0xff]
        %v349 = vsub.f32 1.0, %v348
        %v350 = vlog2.pop %v349
        %v351 = vmul.f32 %v350, 0.6931472
        %v352 = vmax.f32 %v351, -100.0
        %v353 = vadd.f32 %v342, %v352
        %v354 = vsel %vm286, %v348, %v343
        %v355 = vsel %vm286, %v352, %v344
        %v356 = vsel %vm289, %v348, %v345
        %v357 = vsel %vm289, %v352, %v346
        %s358 = scalar_lea.vmem %s198, 40 [#allocation3]
        %v359 = vld [vmem:[%s358] sm:$0xff]
        %v360 = vsub.f32 1.0, %v359
        %v361 = vlog2.pop %v360
        %v362 = vmul.f32 %v361, 0.6931472
        %v363 = vmax.f32 %v362, -100.0
        %v364 = vadd.f32 %v353, %v363
        %v365 = vsel %vm289, %v359, %v354
        %v366 = vsel %vm289, %v363, %v355
        %v367 = vsel %vm292, %v359, %v356
        %v368 = vsel %vm292, %v363, %v357
        %s369 = scalar_lea.vmem %s198, 48 [#allocation3]
        %v370 = vld [vmem:[%s369] sm:$0xff]
        %v371 = vsub.f32 1.0, %v370
        %v372 = vlog2.pop %v371
        %v373 = vmul.f32 %v372, 0.6931472
        %v374 = vmax.f32 %v373, -100.0
        %v375 = vadd.f32 %v364, %v374
        %v376 = vsel %vm292, %v370, %v365
        %v377 = vsel %vm292, %v374, %v366
        %v378 = vsel %vm295, %v370, %v367
        %v379 = vsel %vm295, %v374, %v368
        %s380 = scalar_lea.vmem %s198, 56 [#allocation3]
        %v381 = vld [vmem:[%s380] sm:$0xff]
        %v382 = vsub.f32 1.0, %v381
        %v383 = vlog2.pop %v382
        %v384 = vmul.f32 %v383, 0.6931472
        %v385 = vmax.f32 %v384, -100.0
        %v386 = vadd.f32 %v375, %v385
        %v387 = vsel %vm295, %v381, %v376
        %v388 = vsel %vm295, %v385, %v377
        %v389 = vsel %vm298, %v381, %v378
        %v390 = vsel %vm298, %v385, %v379
        %s391 = scalar_lea.vmem %s198, 64 [#allocation3]
        %v392 = vld [vmem:[%s391] sm:$0xff]
        %v393 = vsub.f32 1.0, %v392
        %v394 = vlog2.pop %v393
        %v395 = vmul.f32 %v394, 0.6931472
        %v396 = vmax.f32 %v395, -100.0
        %v397 = vadd.f32 %v386, %v396
        %v398 = vsel %vm298, %v392, %v387
        %v399 = vsel %vm298, %v396, %v388
        %v400 = vsel %vm301, %v392, %v389
        %v401 = vsel %vm301, %v396, %v390
        %s402 = scalar_lea.vmem %s198, 72 [#allocation3]
        %v403 = vld [vmem:[%s402] sm:$0xff]
        %v404 = vsub.f32 1.0, %v403
        %v405 = vlog2.pop %v404
        %v406 = vmul.f32 %v405, 0.6931472
        %v407 = vmax.f32 %v406, -100.0
        %v408 = vadd.f32 %v397, %v407
        %v409 = vsel %vm301, %v403, %v398
        %v410 = vsel %vm301, %v407, %v399
        %v411 = vlog2.pop %v400
        %v412 = vmul.f32 %v411, 0.6931472
        %v413 = vmax.f32 %v412, -100.0
        %v414 = vlog2.pop %v409
        %v415 = vmul.f32 %v414, 0.6931472
        %v416 = vmax.f32 %v415, -100.0
        %v417 = vsub.f32 1.0, %v305
        %v418 = vsub.f32 %v413, %v401
        %v419 = vmul.f32 %v417, %v418
        %v420 = vadd.f32 %v408, %v419
        %v421 = vsub.f32 %v416, %v410
        %v422 = vmul.f32 %v305, %v421
        %v423 = vadd.f32 %v420, %v422
        %v424 = vsub.f32 0.0, %v423
        %v425 = vlaneseq
        %v426 = vshrl.u32 %v425, 7
        %v427 = vlaneseq
        %v428 = vand.u32 %v427, 127
        %s429 = sadd.s32 %s28, %s29
        %s430 = smul.u32 %s429, 128
        %v431 = vstv %s430
        %v432 = vadd.s32 %v431, %v428
        %v433 = vmul.u32 %v426, 256
        %v434 = vadd.s32 %v433, %v432
        %vm435 = vcmp.lt.s32.totalorder %v434, 256
        %v436 = vsel %vm435, %v424, 0.0
        %v437 = vld [vmem:[#allocation2] sm:$0xff]
        %v438 = vadd.f32 %v437, %v436
        %439 = vst [vmem:[#allocation2] sm:$0xff] %v438
        // Predicated region
        $region41: #{tpu_custom_call.1} parent=27 // pred_check
          %p440 = pneg %p235
        $region42: #{tpu_custom_call.1} parent=27 // pred_check_branch
          %442 = sbr.rel (%p440) target = $region44
        $region43: #{tpu_custom_call.1} parent=27 // pred_region
          %v443 = vld [vmem:[#allocation2] sm:$0xff]
          %444 = vst [vmem:[%s232] sm:$0xff] %v443
        $region44: #{tpu_custom_call.1} parent=27 // pred_fallthru
          _
        %s445 = sand.u32 %s111, 1
        %s446 = scalar_lea.sflag [#allocation5], %s445
        %s447 = sand.u32 %s111, 1
        %s448 = smul.addr %s447, 8
        %s449 = scalar_lea.vmem [#allocation8], %s448
        // Predicated region
        $region45: #{tpu_custom_call.1} parent=27 // pred_check
          %p450 = pneg %p121
        $region46: #{tpu_custom_call.1} parent=27 // pred_check_branch
          %452 = sbr.rel (%p450) target = $region48
        $region47: #{tpu_custom_call.1} parent=27 // pred_region
          %s454 = ssub.s32 128, 128
          %455 = vsyncadd %s446, %s454
          %s456 = smul.addr %s27, 2
          %s457 = sadd.s32 %s28, %s456
          %s458 = smul.addr %s457, 128
          %s459 = scalar_lea.hbm %s2, %s458
          %s461 = sshll.u32 %s449, 4
          %s462 = int_to_ptr.vmem [resolvable:$true] %s461
          %464 = dma.vmem_to_hbm [thread:$0]  %s462, 128, %s459, %s446
        $region48: #{tpu_custom_call.1} parent=27 // pred_fallthru
          _
      $region28: #{tpu_custom_call.1} parent=5 // pred_fallthru
        _
      %p465 = scmp.le.s32.totalorder 2, %s17
      // Predicated region
      $region49: #{tpu_custom_call.1} parent=5 // pred_check
        %p466 = pneg %p465
      $region50: #{tpu_custom_call.1} parent=5 // pred_check_branch
        %468 = sbr.rel (%p466) target = $region52
      $region51: #{tpu_custom_call.1} parent=5 // pred_region
        %s469 = ssub.s32 %s17, 2
        // Predicated region
        $region53: #{tpu_custom_call.1} parent=51 // pred_check
          %p470 = pneg %p127
        $region54: #{tpu_custom_call.1} parent=51 // pred_check_branch
          %472 = sbr.rel (%p470) target = $region56
        $region55: #{tpu_custom_call.1} parent=51 // pred_region
          %s473 = sand.u32 %s112, 1
          %s474 = scalar_lea.sflag [#allocation5], %s473
          %s475 = sand.u32 %s112, 1
          %s476 = smul.addr %s475, 8
          %s477 = scalar_lea.vmem [#allocation8], %s476
          %478 = dma.done %s474, 128
        $region56: #{tpu_custom_call.1} parent=51 // pred_fallthru
          _
      $region52: #{tpu_custom_call.1} parent=5 // pred_fallthru
        _
    $region6: #{tpu_custom_call.1} parent=1 // loop_footer
      %s21 = sadd.s32 1, %s17
    $region7: #{tpu_custom_call.1} parent=1 // loop_footer_branch
      %16 = sbr.rel target = $region3
    $region8: #{tpu_custom_call.1} parent=1 // loop_exit
      _
    %479 = vsyncpa [#allocation4], 1
    %s480 = scalar_lea.sflag [#allocation4], 1
    %481 = vsyncpa %s480, 1
    %482 = vsyncpa [#allocation7], 1
    %s483 = scalar_lea.sflag [#allocation7], 1
    %484 = vsyncpa %s483, 1
    %485 = vsyncpa [#allocation5], 1
    %s486 = scalar_lea.sflag [#allocation5], 1
    %487 = vsyncpa %s486, 1

</llo_original>
